<compile_context>
chip_gen: v6e
topology: v6e:2x2x1
jax: 0.10.0
libtpu: 0.0.40
codegen_flags: <defaults>
</compile_context>

<pallas_src>
import math
from functools import partial

import jax
import jax.numpy as jnp
from jax import lax
from jax.experimental import pallas as pl
from jax.experimental.pallas import tpu as pltpu


def _round_up(v, m):
    return -(-v // m) * m


def _tpu_tuning():
    """Per-generation tuning knobs.

    Returns (vmem_limit_bytes, block_budget_bytes, target_rows, need_two_steps).
    Conservative (v7x-safe: 64 MiB VMEM/TC, 2 TensorCores) unless we positively
    identify a single-TensorCore, 128 MiB-VMEM chip (v5e / v6e).
    """
    kind = ""
    try:
        dev = jax.devices()[0]
        if dev.platform == "tpu":
            kind = dev.device_kind.lower()
    except Exception:
        kind = ""
    single_tc = any(tag in kind for tag in
                    ("v5 lite", "v5e", "v5litepod", "v6 lite", "v6e"))
    if single_tc:
        # One TensorCore: extra grid steps are pure overhead; plenty of VMEM (128 MiB).
        return 96 * 1024 * 1024, 40 * 1024 * 1024, 1024, False
    # v7x-safe defaults (64 MiB/TC, 2 TCs) -- also fine on v4/v5p/unknown chips.
    return 48 * 1024 * 1024, 16 * 1024 * 1024, 2048, True


def _choose_batch_block(B, L, c_in, d_inp, d_model,
                        in_bytes, slab_bytes, out_bytes,
                        block_budget, target_rows, need_two_steps):
    """Largest divisor of B such that the padded, double-buffered blocks + scratch
    fit the (generation-specific) VMEM budget, optionally keeping >= 2 grid steps
    for the 2-TensorCore chips, and stopping once a step has ~target_rows rows."""
    lane = 128
    K = 3 * c_in + d_inp

    def padded_rows(itemsize):
        mult = 8 if itemsize >= 4 else 16   # sublane packing for 32-bit vs 16-bit
        return _round_up(max(L, 1), mult)

    cp = _round_up(c_in, lane)
    dip = _round_up(d_inp, lane)
    kp = _round_up(K, lane)
    dmp = _round_up(d_model, lane)

    lin = padded_rows(in_bytes)
    lsl = padded_rows(slab_bytes)
    lout = padded_rows(out_bytes)

    per_batch = (2 * lin * cp * in_bytes        # x block      (double-buffered)
                 + 2 * lin * dip * in_bytes     # x_mark block (double-buffered)
                 + 2 * lout * dmp * out_bytes   # output block (double-buffered)
                 + lsl * kp * slab_bytes)       # slab scratch (single copy)
    # resident fused weight (conservatively counted double-buffered)
    fixed = 2 * _round_up(K, 8 if in_bytes >= 4 else 16) * dmp * in_bytes

    best = 1
    for d in range(1, B + 1):
        if B % d:
            continue
        if need_two_steps and B >= 2 and B // d < 2:
            break                               # would idle one v7x TensorCore
        if fixed + d * per_batch > block_budget:
            break
        best = d
        if d * L >= target_rows:
            break
    return best


def _make_kernel(b_blk, L, c_in, d_inp):
    K = 3 * c_in + d_inp
    # XLU sublane rotation wants well-formed sublane tiles; fall back to the
    # (always-supported) shifted sliced stores when L is not a multiple of 8.
    use_roll = (L % 8 == 0) and L >= 8

    def kernel(x_ref, xm_ref, w_ref, o_ref, slab_ref):
        # x_ref  : (b_blk, L, c_in)    xm_ref : (b_blk, L, d_inp)
        # w_ref  : (K, d_model)        o_ref  : (b_blk, L, d_model)
        # slab_ref (VMEM scratch)      : (b_blk, L, K) in compute dtype
        def body(b, carry):
            xb = x_ref[b]                              # (L, c_in)
            if L == 1:
                # Degenerate circular conv: prev == next == x.
                slab_ref[b, :, 0:c_in] = xb
                slab_ref[b, :, 2 * c_in:3 * c_in] = xb
            elif use_roll:
                # Circular shifts on the XLU (sublane rotate); shifts non-negative.
                prev = pltpu.roll(xb, shift=1, axis=0)        # prev[t] = x[(t-1) % L]
                nxt = pltpu.roll(xb, shift=L - 1, axis=0)     # nxt[t]  = x[(t+1) % L]
                slab_ref[b, :, 0:c_in] = prev
                slab_ref[b, :, 2 * c_in:3 * c_in] = nxt
            else:
                # Shift folded into the store addressing (fallback for L % 8 != 0).
                slab_ref[b, 1:L, 0:c_in] = xb[0:L - 1, :]
                slab_ref[b, 0:1, 0:c_in] = xb[L - 1:L, :]
                slab_ref[b, 0:L - 1, 2 * c_in:3 * c_in] = xb[1:L, :]
                slab_ref[b, L - 1:L, 2 * c_in:3 * c_in] = xb[0:1, :]
            slab_ref[b, :, c_in:2 * c_in] = xb
            slab_ref[b, :, 3 * c_in:K] = xm_ref[b]

            # One fused MXU matmul (conv taps + temporal linear), f32 accumulation.
            # Dropout = identity (eval mode).
            o_ref[b] = jnp.dot(
                slab_ref[b], w_ref[...], preferred_element_type=jnp.float32
            ).astype(o_ref.dtype)
            return carry

        lax.fori_loop(0, b_blk, body, 0)

    return kernel


def data_embedding_wo_pos(x, x_mark, w_conv, w_temp, *,
                          compute_dtype=jnp.float32, out_dtype=jnp.float32,
                          batch_block=None):
    """DataEmbedding_wo_pos forward (eval mode: dropout == identity).

    Output stores are lane-dense whenever d_model is a multiple of 128 (typical
    Informer configs); smaller d_model still works with masked partial stores.
    """
    B, L, c_in = x.shape
    _, _, d_inp = x_mark.shape
    d_model = w_conv.shape[-1]
    K = 3 * c_in + d_inp

    # Fuse [tap-1 | tap0 | tap+1 | temporal] into ONE (K, d_model) weight, once.
    w_fused = jnp.concatenate([w_conv[0], w_conv[1], w_conv[2], w_temp],
                              axis=0).astype(compute_dtype)
    # Cast inputs once in the wrapper so input DMAs move compute_dtype bytes.
    x = x.astype(compute_dtype)
    x_mark = x_mark.astype(compute_dtype)

    in_bytes = jnp.dtype(compute_dtype).itemsize
    out_bytes = jnp.dtype(out_dtype).itemsize
    vmem_limit, block_budget, target_rows, need_two_steps = _tpu_tuning()

    b_blk = batch_block if batch_block is not None else _choose_batch_block(
        B, L, c_in, d_inp, d_model, in_bytes, in_bytes, out_bytes,
        block_budget, target_rows, need_two_steps)
    assert B % b_blk == 0, "batch_block must divide the batch size"
    grid = (B // b_blk,)

    return pl.pallas_call(
        _make_kernel(b_blk, L, c_in, d_inp),
        out_shape=jax.ShapeDtypeStruct((B, L, d_model), out_dtype),
        grid=grid,
        in_specs=[
            pl.BlockSpec((b_blk, L, c_in), lambda i: (i, 0, 0)),
            pl.BlockSpec((b_blk, L, d_inp), lambda i: (i, 0, 0)),
            pl.BlockSpec((K, d_model), lambda i: (0, 0)),   # resident fused weight
        ],
        out_specs=pl.BlockSpec((b_blk, L, d_model), lambda i: (i, 0, 0)),
        scratch_shapes=[pltpu.VMEM((b_blk, L, K), compute_dtype)],
        compiler_params=pltpu.CompilerParams(
            dimension_semantics=("parallel",),
            vmem_limit_bytes=vmem_limit),
    )(x, x_mark, w_fused)


def _reference(x, x_mark, w_conv, w_temp):
    # Pure-JAX reference of the torch module's forward (eval mode).
    x_prev = jnp.roll(x, 1, axis=1)
    x_next = jnp.roll(x, -1, axis=1)
    conv = (jnp.einsum("blc,cd->bld", x_prev, w_conv[0])
            + jnp.einsum("blc,cd->bld", x, w_conv[1])
            + jnp.einsum("blc,cd->bld", x_next, w_conv[2]))
    return conv + jnp.einsum("blf,fd->bld", x_mark, w_temp)


if __name__ == "__main__":
    # Small, module-consistent shapes (c_in=7 like the ETT datasets, freq='h' -> 4
    # time features, d_model=128 so the output store is lane-dense).
    B, L, c_in, d_model = 4, 16, 7, 128
    d_inp = 4

    key = jax.random.PRNGKey(0)
    k_x, k_xm, k_wc, k_wt, k_x2, k_xm2, k_wc2, k_wt2 = jax.random.split(key, 8)

    x = jax.random.normal(k_x, (B, L, c_in), dtype=jnp.float32)
    x_mark = jax.random.normal(k_xm, (B, L, d_inp), dtype=jnp.float32)

    # Conv1d weight, kaiming_normal(fan_in, leaky_relu): std = sqrt(2)/sqrt(c_in*3),
    # stored as (3, c_in, d_model) (transpose of torch's (d_model, c_in, 3)).
    conv_std = math.sqrt(2.0) / math.sqrt(c_in * 3)
    w_conv = conv_std * jax.random.normal(k_wc, (3, c_in, d_model), dtype=jnp.float32)
    # TimeFeatureEmbedding Linear(d_inp, d_model, bias=False), stored as (d_inp, d_model).
    w_temp = (1.0 / math.sqrt(d_inp)) * jax.random.normal(
        k_wt, (d_inp, d_model), dtype=jnp.float32)

    ref = _reference(x, x_mark, w_conv, w_temp)

    # f32 path
    fwd = jax.jit(data_embedding_wo_pos)
    out = jax.block_until_ready(fwd(x, x_mark, w_conv, w_temp))
    assert out.shape == (B, L, d_model)
    assert jnp.allclose(out, ref, atol=1e-3, rtol=1e-3), "f32 kernel mismatch vs reference"

    # bf16 compute + bf16 output path (v6e/v7x bf16 MXU, halves output HBM bytes).
    fwd_bf16 = jax.jit(partial(data_embedding_wo_pos,
                               compute_dtype=jnp.bfloat16, out_dtype=jnp.bfloat16))
    out_bf16 = jax.block_until_ready(fwd_bf16(x, x_mark, w_conv, w_temp))
    assert out_bf16.dtype == jnp.bfloat16
    assert jnp.allclose(out_bf16.astype(jnp.float32), ref, atol=2.5e-1, rtol=5e-2), \
        "bf16 kernel mismatch vs reference"

    # Robustness check: L not a multiple of 8 (exercises the sliced-store fallback
    # path; the old version forced the whole batch into one block here).
    B2, L2, c2, d2 = 2, 12, 5, 128
    x2 = jax.random.normal(k_x2, (B2, L2, c2), dtype=jnp.float32)
    xm2 = jax.random.normal(k_xm2, (B2, L2, d_inp), dtype=jnp.float32)
    wc2 = conv_std * jax.random.normal(k_wc2, (3, c2, d2), dtype=jnp.float32)
    wt2 = 0.5 * jax.random.normal(k_wt2, (d_inp, d2), dtype=jnp.float32)
    out2 = jax.block_until_ready(jax.jit(data_embedding_wo_pos)(x2, xm2, wc2, wt2))
    assert jnp.allclose(out2, _reference(x2, xm2, wc2, wt2), atol=1e-3, rtol=1e-3), \
        "odd-L kernel mismatch vs reference"

    print("KERNEL_OK")
</pallas_src>

<mosaic_0001>
module attributes {stable_mosaic.version = 11 : i64} {
  func.func @kernel(%arg0: i32, %arg1: memref<2x16x7xf32, #tpu.memory_space<vmem>>, %arg2: memref<2x16x4xf32, #tpu.memory_space<vmem>>, %arg3: memref<25x128xf32, #tpu.memory_space<vmem>>, %arg4: memref<2x16x128xf32, #tpu.memory_space<vmem>>, %arg5: memref<2x16x25xf32, #tpu.memory_space<vmem>>) attributes {dimension_semantics = [#tpu.dimension_semantics<parallel>], iteration_bounds = array<i64: 2>, scalar_prefetch = 0 : i64, scratch_operands = 1 : i64, tpu.core_type = #tpu.core_type<tc>, window_params = [{transform_indices = @transform_0, window_bounds = array<i64: 2, 16, 7>}, {transform_indices = @transform_1, window_bounds = array<i64: 2, 16, 4>}, {pipeline_mode = #tpu.pipeline_mode<synchronous>, transform_indices = @transform_2, window_bounds = array<i64: 25, 128>}, {transform_indices = @transform_3, window_bounds = array<i64: 2, 16, 128>}]} {
    %c0_i32 = arith.constant 0 : i32
    %c2_i32 = arith.constant 2 : i32
    %0 = arith.addi %c0_i32, %c2_i32 : i32
    %c1_i32 = arith.constant 1 : i32
    scf.for %arg6 = %c0_i32 to %0 step %c1_i32  : i32 {
      %1 = arith.index_cast %arg6 : i32 to index
      %c0 = arith.constant 0 : index
      %c0_1 = arith.constant 0 : index
      %2 = vector.load %arg1[%1, %c0, %c0_1] : memref<2x16x7xf32, #tpu.memory_space<vmem>>, vector<1x16x7xf32>
      %3 = vector.shape_cast %2 : vector<1x16x7xf32> to vector<16x7xf32>
      %c1_i32_2 = arith.constant 1 : i32
      %4 = tpu.dynamic_rotate %3 by %c1_i32_2 dim 0 : vector<16x7xf32>, i32 -> vector<16x7xf32>
      %c15_i32 = arith.constant 15 : i32
      %5 = tpu.dynamic_rotate %3 by %c15_i32 dim 0 : vector<16x7xf32>, i32 -> vector<16x7xf32>
      %6 = arith.index_cast %arg6 : i32 to index
      %c0_3 = arith.constant 0 : index
      %c0_4 = arith.constant 0 : index
      %7 = vector.load %arg5[%6, %c0_3, %c0_4] : memref<2x16x25xf32, #tpu.memory_space<vmem>>, vector<1x16x7xf32>
      %8 = vector.shape_cast %7 : vector<1x16x7xf32> to vector<16x7xf32>
      %9 = vector.shape_cast %4 : vector<16x7xf32> to vector<1x16x7xf32>
      tpu.vector_store %arg5[%6, %c0_3, %c0_4], %9 {strides = array<i32>} : memref<2x16x25xf32, #tpu.memory_space<vmem>>, vector<1x16x7xf32>,
      %10 = arith.index_cast %arg6 : i32 to index
      %c0_5 = arith.constant 0 : index
      %c14 = arith.constant 14 : index
      %11 = vector.load %arg5[%10, %c0_5, %c14] : memref<2x16x25xf32, #tpu.memory_space<vmem>>, vector<1x16x7xf32>
      %12 = vector.shape_cast %11 : vector<1x16x7xf32> to vector<16x7xf32>
      %13 = vector.shape_cast %5 : vector<16x7xf32> to vector<1x16x7xf32>
      tpu.vector_store %arg5[%10, %c0_5, %c14], %13 {strides = array<i32>} : memref<2x16x25xf32, #tpu.memory_space<vmem>>, vector<1x16x7xf32>,
      %14 = arith.index_cast %arg6 : i32 to index
      %c0_6 = arith.constant 0 : index
      %c7 = arith.constant 7 : index
      %15 = vector.load %arg5[%14, %c0_6, %c7] : memref<2x16x25xf32, #tpu.memory_space<vmem>>, vector<1x16x7xf32>
      %16 = vector.shape_cast %15 : vector<1x16x7xf32> to vector<16x7xf32>
      %17 = vector.shape_cast %3 : vector<16x7xf32> to vector<1x16x7xf32>
      tpu.vector_store %arg5[%14, %c0_6, %c7], %17 {strides = array<i32>} : memref<2x16x25xf32, #tpu.memory_space<vmem>>, vector<1x16x7xf32>,
      %18 = arith.index_cast %arg6 : i32 to index
      %c0_7 = arith.constant 0 : index
      %c0_8 = arith.constant 0 : index
      %19 = vector.load %arg2[%18, %c0_7, %c0_8] : memref<2x16x4xf32, #tpu.memory_space<vmem>>, vector<1x16x4xf32>
      %20 = vector.shape_cast %19 : vector<1x16x4xf32> to vector<16x4xf32>
      %21 = arith.index_cast %arg6 : i32 to index
      %c0_9 = arith.constant 0 : index
      %c21 = arith.constant 21 : index
      %22 = vector.load %arg5[%21, %c0_9, %c21] : memref<2x16x25xf32, #tpu.memory_space<vmem>>, vector<1x16x4xf32>
      %23 = vector.shape_cast %22 : vector<1x16x4xf32> to vector<16x4xf32>
      %24 = vector.shape_cast %20 : vector<16x4xf32> to vector<1x16x4xf32>
      tpu.vector_store %arg5[%21, %c0_9, %c21], %24 {strides = array<i32>} : memref<2x16x25xf32, #tpu.memory_space<vmem>>, vector<1x16x4xf32>,
      %25 = arith.index_cast %arg6 : i32 to index
      %c0_10 = arith.constant 0 : index
      %c0_11 = arith.constant 0 : index
      %26 = vector.load %arg5[%25, %c0_10, %c0_11] : memref<2x16x25xf32, #tpu.memory_space<vmem>>, vector<1x16x25xf32>
      %27 = vector.shape_cast %26 : vector<1x16x25xf32> to vector<16x25xf32>
      %c0_12 = arith.constant 0 : index
      %c0_13 = arith.constant 0 : index
      %28 = vector.load %arg3[%c0_12, %c0_13] : memref<25x128xf32, #tpu.memory_space<vmem>>, vector<25x128xf32>
      %cst = arith.constant dense<0.000000e+00> : vector<16x128xf32>
      %29 = tpu.matmul %27, %28, %cst {dimension_numbers = #tpu.dot_dimension_numbers<[1], [0], [0], [1], [0, 0, 1, 1], [], []>} : vector<16x25xf32>, vector<25x128xf32>, vector<16x128xf32> -> vector<16x128xf32>
      %30 = arith.index_cast %arg6 : i32 to index
      %c0_14 = arith.constant 0 : index
      %c0_15 = arith.constant 0 : index
      %31 = vector.load %arg4[%30, %c0_14, %c0_15] : memref<2x16x128xf32, #tpu.memory_space<vmem>>, vector<1x16x128xf32>
      %32 = vector.shape_cast %31 : vector<1x16x128xf32> to vector<16x128xf32>
      %33 = vector.shape_cast %29 : vector<16x128xf32> to vector<1x16x128xf32>
      tpu.vector_store %arg4[%30, %c0_14, %c0_15], %33 {strides = array<i32>} : memref<2x16x128xf32, #tpu.memory_space<vmem>>, vector<1x16x128xf32>,
    }
    %c2_i32_0 = arith.constant 2 : i32
    return
  }
  func.func @transform_0(%arg0: i32) -> (i32, i32, i32) {
    %c0_i32 = arith.constant 0 : i32
    %c0_i32_0 = arith.constant 0 : i32
    %c0_i32_1 = arith.constant 0 : i32
    return %arg0, %c0_i32, %c0_i32_0 : i32, i32, i32
  }
  func.func @transform_1(%arg0: i32) -> (i32, i32, i32) {
    %c0_i32 = arith.constant 0 : i32
    %c0_i32_0 = arith.constant 0 : i32
    %c0_i32_1 = arith.constant 0 : i32
    return %arg0, %c0_i32, %c0_i32_0 : i32, i32, i32
  }
  func.func @transform_2(%arg0: i32) -> (i32, i32) {
    %c0_i32 = arith.constant 0 : i32
    %c0_i32_0 = arith.constant 0 : i32
    %c0_i32_1 = arith.constant 0 : i32
    return %c0_i32, %c0_i32_0 : i32, i32
  }
  func.func @transform_3(%arg0: i32) -> (i32, i32, i32) {
    %c0_i32 = arith.constant 0 : i32
    %c0_i32_0 = arith.constant 0 : i32
    %c0_i32_1 = arith.constant 0 : i32
    return %arg0, %c0_i32, %c0_i32_0 : i32, i32, i32
  }
}

</mosaic_0001>

<llo_original>
// kernel: data_embedding_wo_pos.1
$region0: #{data_embedding_wo_pos.1}
  #allocation0 [shape = 'u32[]', space=smem, size = 0x4, offset = 0x4, fixed_abs, tag = 'smem constant byte address 0x4 - core index']
  #allocation1 [shape = 'u32[144,128]{1,0:T(1,128)}', space=vmem, size = 0x12000, scoped, tag = 'internal scratch']
  #allocation2 [shape = 'f32[2,16,25]{2,1,0:T(8,128)}', space=vmem, size = 0x4000, scoped, tag = 'scratch operand']
  %s0 = inlined_call_operand.vmem [shape: f32[4,16,7], index: 0, kind: input, shape index: {}]
  %s1 = inlined_call_operand.vmem [shape: f32[4,16,4], index: 1, kind: input, shape index: {}]
  %s2 = inlined_call_operand.vmem [shape: f32[25,128], index: 2, kind: input, shape index: {}]
  %s3 = inlined_call_operand.hbm [shape: f32[4,16,128], index: 3, kind: output, shape index: {}]
  %s4 = sld [smem:[#allocation0]]
  $region52: #{data_embedding_wo_pos.1} parent=0
    _
  %s6 = ssub.s32 1, %s4
  %s7 = scalar_select 0, %s6, %s4
  $region1: #{data_embedding_wo_pos.1} parent=0
    #allocation3 [shape = 'u8[32768]{0}', space=vmem, size = 0x8000, scoped, tag = 'output window, operand 0']
    #allocation4 [shape = 's32[2]{0}', space=sflag, size = 0x8, scoped, tag = 'scoped memory for data_embedding_wo_pos.1']
    %8 = vsyncpa [#allocation4], 0
    %s9 = scalar_lea.sflag [#allocation4], 1
    %10 = vsyncpa %s9, 0
    loop: start=0, step=1, limit=4
    $region2: #{data_embedding_wo_pos.1} parent=1 // loop_pre_header
      _
    $region3: #{data_embedding_wo_pos.1} parent=1 // loop_header
      %s12 = sphi 0, %s16
      %p13 = scmp.ge.s32.totalorder %s12, 4
      %s22 = sphi 0, %s24
      %s25 = sphi 0, %s22
      %s26 = sphi 0, %s25
      %s42 = sphi 0, %s26
      %s48 = sphi 0, %s50
      %s51 = sphi 0, %s48
      %s52 = sphi 0, %s51
      %s68 = sphi 0, %s52
      %s72 = sphi 0, %s72
      %s74 = sphi 0, %s72
      %s75 = sphi 0, %s74
      %s89 = sphi 0, %s75
      %s95 = sphi 0, %s97
      %s98 = sphi 0, %s95
      %s99 = sphi 0, %s98
      %s115 = sphi 0, %s99
    $region4: #{data_embedding_wo_pos.1} parent=1 // loop_header_branch
      %15 = sbr.rel (%p13) target = $region8
    $region5: #{data_embedding_wo_pos.1} parent=1 // loop_body
      %s17 = ssub.s32 %s12, 1
      %s18 = ssub.s32 %s12, 2
      %s19 = sadd.s32 %s12, 1
      %s20 = ssub.s32 %s12, %s19
      %p21 = scmp.eq.s32.totalorder %s20, 0
      %s23 = sadd.s32 %s22, 1
      %s24 = scalar_select %p21, %s22, %s23
      %p27 = pneg %p21
      %p28 = scmp.eq.s32.totalorder %s12, 1
      %p29 = por %p27, %p28
      %p30 = scmp.ne.s32.totalorder %s22, %s25
      %p31 = scmp.eq.s32.totalorder %s12, 0
      %p32 = por %p30, %p31
      %p33 = scmp.ne.s32.totalorder %s22, %s25
      %p34 = scmp.eq.s32.totalorder %s17, 1
      %p35 = por %p33, %p34
      %p36 = scmp.ne.s32.totalorder %s25, %s26
      %p37 = scmp.eq.s32.totalorder %s17, 0
      %p38 = por %p36, %p37
      %p39 = scmp.ne.s32.totalorder %s25, %s26
      %p40 = scmp.eq.s32.totalorder %s18, 1
      %p41 = por %p39, %p40
      %p43 = scmp.ne.s32.totalorder %s26, %s42
      %p44 = scmp.eq.s32.totalorder %s18, 0
      %p45 = por %p43, %p44
      %s46 = ssub.s32 %s12, %s19
      %p47 = scmp.eq.s32.totalorder %s46, 0
      %s49 = sadd.s32 %s48, 1
      %s50 = scalar_select %p47, %s48, %s49
      %p53 = pneg %p47
      %p54 = scmp.eq.s32.totalorder %s12, 1
      %p55 = por %p53, %p54
      %p56 = scmp.ne.s32.totalorder %s48, %s51
      %p57 = scmp.eq.s32.totalorder %s12, 0
      %p58 = por %p56, %p57
      %p59 = scmp.ne.s32.totalorder %s48, %s51
      %p60 = scmp.eq.s32.totalorder %s17, 1
      %p61 = por %p59, %p60
      %p62 = scmp.ne.s32.totalorder %s51, %s52
      %p63 = scmp.eq.s32.totalorder %s17, 0
      %p64 = por %p62, %p63
      %p65 = scmp.ne.s32.totalorder %s51, %s52
      %p66 = scmp.eq.s32.totalorder %s18, 1
      %p67 = por %p65, %p66
      %p69 = scmp.ne.s32.totalorder %s52, %s68
      %p70 = scmp.eq.s32.totalorder %s18, 0
      %p71 = por %p69, %p70
      %s73 = sadd.s32 %s72, 1
      %p76 = scmp.eq.s32.totalorder %s12, 1
      %p77 = scmp.ne.s32.totalorder %s72, %s74
      %p78 = scmp.eq.s32.totalorder %s12, 0
      %p79 = por %p77, %p78
      %p80 = scmp.ne.s32.totalorder %s72, %s74
      %p81 = scmp.eq.s32.totalorder %s17, 1
      %p82 = por %p80, %p81
      %p83 = scmp.ne.s32.totalorder %s74, %s75
      %p84 = scmp.eq.s32.totalorder %s17, 0
      %p85 = por %p83, %p84
      %p86 = scmp.ne.s32.totalorder %s74, %s75
      %p87 = scmp.eq.s32.totalorder %s18, 1
      %p88 = por %p86, %p87
      %p90 = scmp.ne.s32.totalorder %s75, %s89
      %p91 = scmp.eq.s32.totalorder %s18, 0
      %p92 = por %p90, %p91
      %s93 = ssub.s32 %s12, %s19
      %p94 = scmp.eq.s32.totalorder %s93, 0
      %s96 = sadd.s32 %s95, 1
      %s97 = scalar_select %p94, %s95, %s96
      %p100 = pneg %p94
      %p101 = scmp.eq.s32.totalorder %s12, 1
      %p102 = por %p100, %p101
      %p103 = scmp.ne.s32.totalorder %s95, %s98
      %p104 = scmp.eq.s32.totalorder %s12, 0
      %p105 = por %p103, %p104
      %p106 = scmp.ne.s32.totalorder %s95, %s98
      %p107 = scmp.eq.s32.totalorder %s17, 1
      %p108 = por %p106, %p107
      %p109 = scmp.ne.s32.totalorder %s98, %s99
      %p110 = scmp.eq.s32.totalorder %s17, 0
      %p111 = por %p109, %p110
      %p112 = scmp.ne.s32.totalorder %s98, %s99
      %p113 = scmp.eq.s32.totalorder %s18, 1
      %p114 = por %p112, %p113
      %p116 = scmp.ne.s32.totalorder %s99, %s115
      %p117 = scmp.eq.s32.totalorder %s18, 0
      %p118 = por %p116, %p117
      %p119 = scmp.le.s32.totalorder 1, %s12
      %p120 = scmp.lt.s32.totalorder %s12, 3
      %p121 = pnand %p119, %p120
      %p122 = pneg %p121
      // Predicated region
      $region9: #{data_embedding_wo_pos.1} parent=5 // pred_check
        _
      $region10: #{data_embedding_wo_pos.1} parent=5 // pred_check_branch
        %124 = sbr.rel (%p121) target = $region12
      $region11: #{data_embedding_wo_pos.1} parent=5 // pred_region
        %s125 = ssub.s32 %s12, 1
        // Predicated region
        $region13: #{data_embedding_wo_pos.1} parent=11 // pred_check
          %p126 = pneg %p85
        $region14: #{data_embedding_wo_pos.1} parent=11 // pred_check_branch
          %128 = sbr.rel (%p126) target = $region16
        $region15: #{data_embedding_wo_pos.1} parent=11 // pred_region
          _
        $region16: #{data_embedding_wo_pos.1} parent=11 // pred_fallthru
          _
      $region12: #{data_embedding_wo_pos.1} parent=5 // pred_fallthru
        _
      %p129 = scmp.lt.s32.totalorder %s12, 2
      // Predicated region
      $region17: #{data_embedding_wo_pos.1} parent=5 // pred_check
        %p130 = pneg %p129
      $region18: #{data_embedding_wo_pos.1} parent=5 // pred_check_branch
        %132 = sbr.rel (%p130) target = $region20
      $region19: #{data_embedding_wo_pos.1} parent=5 // pred_region
        // Predicated region
        $region21: #{data_embedding_wo_pos.1} parent=19 // pred_check
          %p133 = pneg %p32
        $region22: #{data_embedding_wo_pos.1} parent=19 // pred_check_branch
          %135 = sbr.rel (%p133) target = $region24
        $region23: #{data_embedding_wo_pos.1} parent=19 // pred_region
          %s136 = smul.u32 2, %s12
          %p137 = scmp.lt.s32.totalorder %s136, 3
          %s138 = scalar_select %p137, %s136, 3
          %s139 = smul.addr %s138, 2
          %s140 = smul.addr %s139, 8
          %s141 = scalar_lea.vmem %s0, %s140
          %s142 = smul.u32 2, %s12
        $region24: #{data_embedding_wo_pos.1} parent=19 // pred_fallthru
          _
        // Predicated region
        $region25: #{data_embedding_wo_pos.1} parent=19 // pred_check
          %p143 = pneg %p58
        $region26: #{data_embedding_wo_pos.1} parent=19 // pred_check_branch
          %145 = sbr.rel (%p143) target = $region28
        $region27: #{data_embedding_wo_pos.1} parent=19 // pred_region
          %s146 = smul.u32 2, %s12
          %p147 = scmp.lt.s32.totalorder %s146, 3
          %s148 = scalar_select %p147, %s146, 3
          %s149 = smul.addr %s148, 2
          %s150 = smul.addr %s149, 8
          %s151 = scalar_lea.vmem %s1, %s150
          %s152 = smul.u32 2, %s12
        $region28: #{data_embedding_wo_pos.1} parent=19 // pred_fallthru
          _
      $region20: #{data_embedding_wo_pos.1} parent=5 // pred_fallthru
        _
      %p153 = scmp.le.s32.totalorder 1, %s12
      %p154 = scmp.lt.s32.totalorder %s12, 3
      %p155 = pnand %p153, %p154
      %p156 = pneg %p155
      // Predicated region
      $region29: #{data_embedding_wo_pos.1} parent=5 // pred_check
        _
      $region30: #{data_embedding_wo_pos.1} parent=5 // pred_check_branch
        %158 = sbr.rel (%p155) target = $region32
      $region31: #{data_embedding_wo_pos.1} parent=5 // pred_region
        %s159 = ssub.s32 %s12, 1
        %s160 = smul.u32 2, %s17
        %p161 = scmp.lt.s32.totalorder %s160, 3
        %s162 = scalar_select %p161, %s160, 3
        %s163 = smul.addr %s162, 2
        %s164 = smul.addr %s163, 8
        %s165 = scalar_lea.vmem %s0, %s164
        %p166 = pneg %p38
        %p167 = pneg %p35
        %s168 = smul.u32 2, %s17
        %p169 = scmp.lt.s32.totalorder %s168, 3
        %s170 = scalar_select %p169, %s168, 3
        %s171 = smul.addr %s170, 2
        %s172 = smul.addr %s171, 8
        %s173 = scalar_lea.vmem %s1, %s172
        %p174 = pneg %p64
        %p175 = pneg %p61
        %p176 = pneg %p85
        %p177 = pneg %p82
        %p178 = pneg %p111
        %p179 = pneg %p108
        %s180 = sand.u32 %s98, 1
        %s181 = scalar_lea.sflag [#allocation4], %s180
        %s182 = sand.u32 %s98, 1
        %s183 = smul.addr %s182, 32
        %s184 = scalar_lea.vmem [#allocation3], %s183
        %s185 = smul.u32 2, %s17
        %p186 = scmp.lt.s32.totalorder %s185, 3
        %s187 = scalar_select %p186, %s185, 3
        %s188 = smul.addr %s187, 2
        %s189 = smul.addr %s188, 8
        %s190 = scalar_lea.vmem %s0, %s189
        %s191 = smul.u32 2, %s17
        %s192 = smul.u32 2, %s17
        %p193 = scmp.lt.s32.totalorder %s192, 3
        %s194 = scalar_select %p193, %s192, 3
        %s195 = smul.addr %s194, 2
        %s196 = smul.addr %s195, 8
        %s197 = scalar_lea.vmem %s1, %s196
        %s198 = smul.u32 2, %s17
        %s199 = smul.u32 2, %s17
        loop: start=0, step=1, limit=2
        $region33: #{data_embedding_wo_pos.1} parent=31 // loop_pre_header
          _
        $region34: #{data_embedding_wo_pos.1} parent=31 // loop_header
          %s201 = sphi 0, %s205
          %p202 = scmp.ge.s32.totalorder %s201, 2
        $region35: #{data_embedding_wo_pos.1} parent=31 // loop_header_branch
          %204 = sbr.rel (%p202) target = $region39
        $region36: #{data_embedding_wo_pos.1} parent=31 // loop_body
          %s206 = smul.u32 %s201, 16
          %s207 = scalar_lea.vmem %s190, %s206
          %v208 = vld [vmem:[%s207] sm:$0xff]
          %v209 = vld [vmem:[%s207 + $0x8] sm:$0xff]
          %v210 = vrot.slane %v208, 7
          %v211 = vrot.slane %v209, 7
          %v212 = vlaneseq
          %v213 = vshrl.u32 %v212, 7
          %vm214 = vcmp.lt.s32.totalorder %v213, 1
          %v215 = vsel %vm214, %v210, %v211
          %v216 = vsel %vm214, %v211, %v210
          %v217 = vrot.slane %v208, 1
          %v218 = vrot.slane %v209, 1
          %vm219 = vcmp.lt.s32.totalorder %v213, 7
          %v220 = vsel %vm219, %v217, %v218
          %v221 = vsel %vm219, %v218, %v217
          %s222 = scalar_lea.vmem [#allocation2], %s206
          %vm223 = vcmask 56320
          %224 = vst.msk [vmem:[%s222] sm:$0xff] %vm223, %v216
          %225 = vst.msk [vmem:[%s222 + $0x8] sm:$0xff] %vm223, %v215
          %228 = vrot.lane.b32.xlu0 %v220, 14
          %v229 = vpop.permute.xlu0 %228
          %230 = vrot.lane.b32.xlu0 %v221, 14
          %v231 = vpop.permute.xlu0 %230
          %vm234 = vcmask 171120
          %235 = vst.msk [vmem:[%s222] sm:$0xff] %vm234, %v229
          %236 = vst.msk [vmem:[%s222 + $0x8] sm:$0xff] %vm234, %v231
          %239 = vrot.lane.b32.xlu0 %v208, 7
          %v240 = vpop.permute.xlu0 %239
          %241 = vrot.lane.b32.xlu0 %v209, 7
          %v242 = vpop.permute.xlu0 %241
          %vm245 = vcmask 113720
          %246 = vst.msk [vmem:[%s222] sm:$0xff] %vm245, %v240
          %247 = vst.msk [vmem:[%s222 + $0x8] sm:$0xff] %vm245, %v242
          %s248 = scalar_lea.vmem %s197, %s206
          %v249 = vld [vmem:[%s248] sm:$0xff]
          %v250 = vld [vmem:[%s248 + $0x8] sm:$0xff]
          %253 = vrot.lane.b32.xlu0 %v249, 21
          %v254 = vpop.permute.xlu0 %253
          %255 = vrot.lane.b32.xlu0 %v250, 21
          %v256 = vpop.permute.xlu0 %255
          %vm259 = vcmask 203944
          %260 = vst.msk [vmem:[%s222] sm:$0xff] %vm259, %v254
          %261 = vst.msk [vmem:[%s222 + $0x8] sm:$0xff] %vm259, %v256
          %v262 = vld [vmem:[%s222] sm:$0xff]
          %v263 = vld [vmem:[%s222 + $0x8] sm:$0xff]
          %v264 = vld [vmem:[%s2] sm:$0xff]
          %v265 = vld [vmem:[%s2 + $0x8] sm:$0xff]
          %v266 = vld [vmem:[%s2 + $0x10] sm:$0xff]
          %v267 = vld [vmem:[%s2 + $0x18] sm:$0x1]
          %vm268 = vcmask 203776
          %v270 = vsel %vm268, %v262, 0
          %v273 = vsel %vm268, %v263, 0
          %vm275 = vcmask 1040384
          %v277 = vsel %vm275, %v267, 0
          %279 = vmatprep.subr.mxu0 0.0
          %280 = vmatpush1.msra.mxu0 0.0
          %281 = vmatprep.subr.mxu0 0.0
          %282 = vmatpush1.msra.mxu0 0.0
          %283 = vmatprep.subr.mxu0 0.0
          %284 = vmatpush1.msra.mxu0 0.0
          %285 = vmatprep.subr.mxu0 0.0
          %286 = vmatpush1.msra.mxu0 0.0
          %287 = vmatprep.subr.mxu0 0.0
          %288 = vmatpush1.msra.mxu0 0.0
          %289 = vmatprep.subr.mxu0 0.0
          %290 = vmatpush1.msra.mxu0 0.0
          %291 = vmatprep.subr.mxu0 0.0
          %292 = vmatpush1.msra.mxu0 0.0
          %293 = vmatprep.subr.mxu0 0.0
          %294 = vmatpush1.msra.mxu0 0.0
          %295 = vmatprep.subr.mxu0 0.0
          %296 = vmatpush1.msra.mxu0 0.0
          %297 = vmatprep.subr.mxu0 0.0
          %298 = vmatpush1.msra.mxu0 0.0
          %299 = vmatprep.subr.mxu0 0.0
          %300 = vmatpush1.msra.mxu0 0.0
          %301 = vmatprep.subr.mxu0 0.0
          %302 = vmatpush1.msra.mxu0 0.0
          %303 = vmatprep.subr.mxu0 0.0
          %304 = vmatpush1.msra.mxu0 %v277
          %305 = vmatprep.subr.mxu0 0.0
          %306 = vmatpush1.msra.mxu0 %v266
          %307 = vmatprep.subr.mxu0 0.0
          %308 = vmatpush1.msra.mxu0 %v265
          %309 = vmatprep.subr.mxu0 0.0
          %310 = vmatpush1.msra.mxu0 %v264
          %311 = vmatprep.subr.mxu0 0.0
          %312 = vmatpush2.msra.mxu0 0.0
          %313 = vmatprep.subr.mxu0 0.0
          %314 = vmatpush2.msra.mxu0 0.0
          %315 = vmatprep.subr.mxu0 0.0
          %316 = vmatpush2.msra.mxu0 0.0
          %317 = vmatprep.subr.mxu0 0.0
          %318 = vmatpush2.msra.mxu0 0.0
          %319 = vmatprep.subr.mxu0 0.0
          %320 = vmatpush2.msra.mxu0 0.0
          %321 = vmatprep.subr.mxu0 0.0
          %322 = vmatpush2.msra.mxu0 0.0
          %323 = vmatprep.subr.mxu0 0.0
          %324 = vmatpush2.msra.mxu0 0.0
          %325 = vmatprep.subr.mxu0 0.0
          %326 = vmatpush2.msra.mxu0 0.0
          %327 = vmatprep.subr.mxu0 0.0
          %328 = vmatpush2.msra.mxu0 0.0
          %329 = vmatprep.subr.mxu0 0.0
          %330 = vmatpush2.msra.mxu0 0.0
          %331 = vmatprep.subr.mxu0 0.0
          %332 = vmatpush2.msra.mxu0 0.0
          %333 = vmatprep.subr.mxu0 0.0
          %334 = vmatpush2.msra.mxu0 0.0
          %335 = vmatprep.subr.mxu0 0.0
          %336 = vmatpush2.msra.mxu0 0.0
          %337 = vmatprep.subr.mxu0 0.0
          %338 = vmatpush2.msra.mxu0 0.0
          %339 = vmatprep.subr.mxu0 0.0
          %340 = vmatpush2.msra.mxu0 0.0
          %341 = vmatprep.subr.mxu0 0.0
          %342 = vmatpush2.msra.mxu0 0.0
          %343 = vmatprep.mubr.f32.mxu0 0.0
          %344 = vmatmul.mubr.f32.gmra.mxu0 %v270
          %v345 = vpop.f32.mrf.mxu0
          %v346 = vadd.f32 0.0, %v345
          %v347 = vpop.f32.mrf.mxu0
          %348 = vmatprep.mubr.f32.mxu0 0.0
          %349 = vmatmul.mubr.f32.gmra.mxu0 %v273
          %v350 = vpop.f32.mrf.mxu0
          %v351 = vadd.f32 0.0, %v350
          %v352 = vpop.f32.mrf.mxu0
          %353 = vdwg.mxu0
          %s354 = scalar_lea.vmem %s184, %s206 [#allocation3]
          %355 = vst [vmem:[%s354] sm:$0xff] %v346
          %356 = vst [vmem:[%s354 + $0x8] sm:$0xff] %v351
        $region37: #{data_embedding_wo_pos.1} parent=31 // loop_footer
          %s205 = sadd.s32 1, %s201
        $region38: #{data_embedding_wo_pos.1} parent=31 // loop_footer_branch
          %200 = sbr.rel target = $region34
        $region39: #{data_embedding_wo_pos.1} parent=31 // loop_exit
          _
        %s357 = sand.u32 %s98, 1
        %s358 = scalar_lea.sflag [#allocation4], %s357
        %s359 = sand.u32 %s98, 1
        %s360 = smul.addr %s359, 32
        %s361 = scalar_lea.vmem [#allocation3], %s360
        // Predicated region
        $region40: #{data_embedding_wo_pos.1} parent=31 // pred_check
          %p362 = pneg %p108
        $region41: #{data_embedding_wo_pos.1} parent=31 // pred_check_branch
          %364 = sbr.rel (%p362) target = $region43
        $region42: #{data_embedding_wo_pos.1} parent=31 // pred_region
          %s365 = smul.u32 2, %s17
          %s367 = ssub.s32 512, 512
          %368 = vsyncadd %s358, %s367
          %s369 = smul.addr %s365, 2
          %s370 = smul.addr %s369, 128
          %s371 = scalar_lea.hbm %s3, %s370
          %s372 = sshll.u32 %s361, 4
          %s373 = int_to_ptr.vmem [resolvable:$true] %s372
          %378 = dma.vmem_to_hbm [thread:$0]  %s373, 512, %s371, %s358, 128, 128, 8
        $region43: #{data_embedding_wo_pos.1} parent=31 // pred_fallthru
          _
      $region32: #{data_embedding_wo_pos.1} parent=5 // pred_fallthru
        _
      %p379 = scmp.le.s32.totalorder 2, %s12
      // Predicated region
      $region44: #{data_embedding_wo_pos.1} parent=5 // pred_check
        %p380 = pneg %p379
      $region45: #{data_embedding_wo_pos.1} parent=5 // pred_check_branch
        %382 = sbr.rel (%p380) target = $region47
      $region46: #{data_embedding_wo_pos.1} parent=5 // pred_region
        %s383 = ssub.s32 %s12, 2
        // Predicated region
        $region48: #{data_embedding_wo_pos.1} parent=46 // pred_check
          %p384 = pneg %p114
        $region49: #{data_embedding_wo_pos.1} parent=46 // pred_check_branch
          %386 = sbr.rel (%p384) target = $region51
        $region50: #{data_embedding_wo_pos.1} parent=46 // pred_region
          %s387 = sand.u32 %s99, 1
          %s388 = scalar_lea.sflag [#allocation4], %s387
          %s389 = sand.u32 %s99, 1
          %s390 = smul.addr %s389, 32
          %s391 = scalar_lea.vmem [#allocation3], %s390
          %392 = dma.done %s388, 512
        $region51: #{data_embedding_wo_pos.1} parent=46 // pred_fallthru
          _
      $region47: #{data_embedding_wo_pos.1} parent=5 // pred_fallthru
        _
    $region6: #{data_embedding_wo_pos.1} parent=1 // loop_footer
      %s16 = sadd.s32 1, %s12
    $region7: #{data_embedding_wo_pos.1} parent=1 // loop_footer_branch
      %11 = sbr.rel target = $region3
    $region8: #{data_embedding_wo_pos.1} parent=1 // loop_exit
      _
    %393 = vsyncpa [#allocation4], 1
    %s394 = scalar_lea.sflag [#allocation4], 1
    %395 = vsyncpa %s394, 1

</llo_original>
